<compile_context>
chip_gen: v6e
topology: v6e:2x2x1
jax: 0.10.0
libtpu: 0.0.40
codegen_flags: <defaults>
</compile_context>

<pallas_src>
import jax
import jax.numpy as jnp
from jax.experimental import pallas as pl
from jax.experimental.pallas import tpu as pltpu


def _add_kernel(a_ref, b_ref, o_ref):
    o_ref[...] = a_ref[...] + b_ref[...]


_SMALL_BYTES = 1 << 20                   # below ~1 MiB: XLA fused add wins.
_TARGET_TILE_BYTES = 4 * 1024 * 1024     # ~4 MiB/tile -> ~24 MiB live (3 bufs, double-buffered)
_VMEM_LIMIT_BYTES = 32 * 1024 * 1024     # explicit scoped-VMEM budget (safe on v5e/v6e/v7x)


def pallas_add(a, b, *, force_pallas=False):
    """Elementwise add of two identically-shaped arrays via a tiled Pallas TPU kernel."""
    assert a.shape == b.shape and a.dtype == b.dtype
    orig_shape = a.shape
    total = a.size
    itemsize = jnp.dtype(a.dtype).itemsize

    # Tiny tensors: launch + per-step overhead dominates; let XLA fuse the add.
    if (total * itemsize < _SMALL_BYTES) and not force_pallas:
        return a + b

    # Widest lane width (multiple of 128) that divides `total` exactly:
    # no padding, no output slice, fully unmasked lane-wide vector stores.
    lane = None
    for cand in (1024, 512, 256, 128):
        if total % cand == 0:
            lane = cand
            break
    if lane is None:
        # TODO(synk): element count not a multiple of 128 -- fall back to XLA's fused add.
        return a + b

    rows = total // lane
    sub_mult = max(8, 32 // itemsize)  # sublane multiple: 8 (f32), 16 (bf16), 32 (int8)

    if rows <= sub_mult:
        # Single full-extent block (full array dims are always legal block dims).
        br = rows
    else:
        # Target ~4 MiB tiles, rounded to a sublane multiple.
        br = max(sub_mult,
                 (_TARGET_TILE_BYTES // (lane * itemsize)) // sub_mult * sub_mult)
        # Keep the grid length >= 2 so the "parallel" axis can be sharded
        # across both v7x TensorCores (harmless on single-TC v5e/v6e).
        half = pl.cdiv(pl.cdiv(rows, 2), sub_mult) * sub_mult
        br = min(br, half, rows)

    grid = (pl.cdiv(rows, br),)  # last block may be ragged -> Pallas masks it

    a2 = a.reshape(rows, lane)
    b2 = b.reshape(rows, lane)

    out2 = pl.pallas_call(
        _add_kernel,
        out_shape=jax.ShapeDtypeStruct((rows, lane), a.dtype),
        grid=grid,
        in_specs=[
            pl.BlockSpec((br, lane), lambda i: (i, 0)),
            pl.BlockSpec((br, lane), lambda i: (i, 0)),
        ],
        out_specs=pl.BlockSpec((br, lane), lambda i: (i, 0)),
        compiler_params=pltpu.CompilerParams(
            dimension_semantics=("parallel",),
            vmem_limit_bytes=_VMEM_LIMIT_BYTES,
        ),
        cost_estimate=pl.CostEstimate(
            flops=total,
            transcendentals=0,
            bytes_accessed=3 * total * itemsize,
        ),
    )(a2, b2)

    return out2.reshape(orig_shape)


if __name__ == "__main__":
    key = jax.random.PRNGKey(0)
    k1, k2 = jax.random.split(key)
    # Shapes from the original module's forward: x171, x161 are (1, 512, 14, 14).
    x171 = jax.random.normal(k1, (1, 512, 14, 14), dtype=jnp.float32)
    x161 = jax.random.normal(k2, (1, 512, 14, 14), dtype=jnp.float32)

    ref = x171 + x161

    # Exercise the actual Pallas kernel path (the default dispatch would route
    # this 392 KiB tensor to XLA's fused add).
    out_kernel = pallas_add(x171, x161, force_pallas=True)
    jax.block_until_ready(out_kernel)
    assert out_kernel.shape == ref.shape
    assert jnp.allclose(out_kernel, ref, atol=1e-6, rtol=1e-6)

    # Also exercise the production dispatch path (small-tensor fallback).
    out_dispatch = pallas_add(x171, x161)
    jax.block_until_ready(out_dispatch)
    assert jnp.allclose(out_dispatch, ref, atol=1e-6, rtol=1e-6)

    print("KERNEL_OK")
</pallas_src>

<mosaic_0001>
module attributes {stable_mosaic.version = 11 : i64} {
  func.func @_add_kernel(%arg0: i32, %arg1: memref<56x1024xf32, #tpu.memory_space<vmem>>, %arg2: memref<56x1024xf32, #tpu.memory_space<vmem>>, %arg3: memref<56x1024xf32, #tpu.memory_space<vmem>>) attributes {dimension_semantics = [#tpu.dimension_semantics<parallel>], iteration_bounds = array<i64: 2>, scalar_prefetch = 0 : i64, scratch_operands = 0 : i64, tpu.core_type = #tpu.core_type<tc>, window_params = [{transform_indices = @transform_0, window_bounds = array<i64: 56, 1024>}, {transform_indices = @transform_1, window_bounds = array<i64: 56, 1024>}, {transform_indices = @transform_2, window_bounds = array<i64: 56, 1024>}]} {
    %c0 = arith.constant 0 : index
    %c0_0 = arith.constant 0 : index
    %0 = vector.load %arg1[%c0, %c0_0] : memref<56x1024xf32, #tpu.memory_space<vmem>>, vector<56x1024xf32>
    %c0_1 = arith.constant 0 : index
    %c0_2 = arith.constant 0 : index
    %1 = vector.load %arg2[%c0_1, %c0_2] : memref<56x1024xf32, #tpu.memory_space<vmem>>, vector<56x1024xf32>
    %2 = arith.addf %0, %1 : vector<56x1024xf32>
    %c0_3 = arith.constant 0 : index
    %c0_4 = arith.constant 0 : index
    %3 = vector.load %arg3[%c0_3, %c0_4] : memref<56x1024xf32, #tpu.memory_space<vmem>>, vector<56x1024xf32>
    tpu.vector_store %arg3[%c0_3, %c0_4], %2 {strides = array<i32>} : memref<56x1024xf32, #tpu.memory_space<vmem>>, vector<56x1024xf32>,
    return
  }
  func.func @transform_0(%arg0: i32) -> (i32, i32) {
    %c0_i32 = arith.constant 0 : i32
    %c0_i32_0 = arith.constant 0 : i32
    return %arg0, %c0_i32 : i32, i32
  }
  func.func @transform_1(%arg0: i32) -> (i32, i32) {
    %c0_i32 = arith.constant 0 : i32
    %c0_i32_0 = arith.constant 0 : i32
    return %arg0, %c0_i32 : i32, i32
  }
  func.func @transform_2(%arg0: i32) -> (i32, i32) {
    %c0_i32 = arith.constant 0 : i32
    %c0_i32_0 = arith.constant 0 : i32
    return %arg0, %c0_i32 : i32, i32
  }
}

</mosaic_0001>

<llo_original>
// kernel: tpu_custom_call.1
$region0: #{tpu_custom_call.1}
  #allocation0 [shape = 'u32[]', space=smem, size = 0x4, offset = 0x4, fixed_abs, tag = 'smem constant byte address 0x4 - core index']
  #allocation1 [shape = 'u32[144,128]{1,0:T(1,128)}', space=vmem, size = 0x12000, scoped, tag = 'internal scratch']
  %s0 = inlined_call_operand.hbm [shape: f32[98,1024], index: 0, kind: input, shape index: {}]
  %s1 = inlined_call_operand.hbm [shape: f32[98,1024], index: 1, kind: input, shape index: {}]
  %s2 = inlined_call_operand.hbm [shape: f32[98,1024], index: 2, kind: output, shape index: {}]
  %s3 = sld [smem:[#allocation0]]
  $region49: #{tpu_custom_call.1} parent=0
    _
  %s5 = ssub.s32 1, %s3
  %s6 = scalar_select 0, %s5, %s3
  $region1: #{tpu_custom_call.1} parent=0
    #allocation2 [shape = 'u8[458752]{0}', space=vmem, size = 0x70000, scoped, tag = 'input window, operand 0']
    #allocation3 [shape = 's32[2]{0}', space=sflag, size = 0x8, scoped, tag = 'scoped memory for tpu_custom_call.1']
    #allocation4 [shape = 's32[2]{0}', space=sflag, size = 0x8, scoped, tag = 'scoped memory for tpu_custom_call.1']
    #allocation5 [shape = 'u8[458752]{0}', space=vmem, size = 0x70000, scoped, tag = 'input window, operand 1']
    #allocation6 [shape = 's32[2]{0}', space=sflag, size = 0x8, scoped, tag = 'scoped memory for tpu_custom_call.1']
    #allocation7 [shape = 'u8[458752]{0}', space=vmem, size = 0x70000, scoped, tag = 'output window, operand 0']
    %7 = vsyncpa [#allocation3], 0
    %s8 = scalar_lea.sflag [#allocation3], 1
    %9 = vsyncpa %s8, 0
    %10 = vsyncpa [#allocation6], 0
    %s11 = scalar_lea.sflag [#allocation6], 1
    %12 = vsyncpa %s11, 0
    %13 = vsyncpa [#allocation4], 0
    %s14 = scalar_lea.sflag [#allocation4], 1
    %15 = vsyncpa %s14, 0
    loop: start=0, step=1, limit=4
    $region2: #{tpu_custom_call.1} parent=1 // loop_pre_header
      _
    $region3: #{tpu_custom_call.1} parent=1 // loop_header
      %s17 = sphi 0, %s21
      %p18 = scmp.ge.s32.totalorder %s17, 4
      %s27 = sphi 0, %s29
      %s30 = sphi 0, %s27
      %s31 = sphi 0, %s30
      %s47 = sphi 0, %s31
      %s53 = sphi 0, %s55
      %s56 = sphi 0, %s53
      %s57 = sphi 0, %s56
      %s73 = sphi 0, %s57
      %s79 = sphi 0, %s81
      %s82 = sphi 0, %s79
      %s83 = sphi 0, %s82
      %s99 = sphi 0, %s83
    $region4: #{tpu_custom_call.1} parent=1 // loop_header_branch
      %20 = sbr.rel (%p18) target = $region8
    $region5: #{tpu_custom_call.1} parent=1 // loop_body
      %s22 = ssub.s32 %s17, 1
      %s23 = ssub.s32 %s17, 2
      %s24 = sadd.s32 %s17, 1
      %s25 = ssub.s32 %s17, %s24
      %p26 = scmp.eq.s32.totalorder %s25, 0
      %s28 = sadd.s32 %s27, 1
      %s29 = scalar_select %p26, %s27, %s28
      %p32 = pneg %p26
      %p33 = scmp.eq.s32.totalorder %s17, 1
      %p34 = por %p32, %p33
      %p35 = scmp.ne.s32.totalorder %s27, %s30
      %p36 = scmp.eq.s32.totalorder %s17, 0
      %p37 = por %p35, %p36
      %p38 = scmp.ne.s32.totalorder %s27, %s30
      %p39 = scmp.eq.s32.totalorder %s22, 1
      %p40 = por %p38, %p39
      %p41 = scmp.ne.s32.totalorder %s30, %s31
      %p42 = scmp.eq.s32.totalorder %s22, 0
      %p43 = por %p41, %p42
      %p44 = scmp.ne.s32.totalorder %s30, %s31
      %p45 = scmp.eq.s32.totalorder %s23, 1
      %p46 = por %p44, %p45
      %p48 = scmp.ne.s32.totalorder %s31, %s47
      %p49 = scmp.eq.s32.totalorder %s23, 0
      %p50 = por %p48, %p49
      %s51 = ssub.s32 %s17, %s24
      %p52 = scmp.eq.s32.totalorder %s51, 0
      %s54 = sadd.s32 %s53, 1
      %s55 = scalar_select %p52, %s53, %s54
      %p58 = pneg %p52
      %p59 = scmp.eq.s32.totalorder %s17, 1
      %p60 = por %p58, %p59
      %p61 = scmp.ne.s32.totalorder %s53, %s56
      %p62 = scmp.eq.s32.totalorder %s17, 0
      %p63 = por %p61, %p62
      %p64 = scmp.ne.s32.totalorder %s53, %s56
      %p65 = scmp.eq.s32.totalorder %s22, 1
      %p66 = por %p64, %p65
      %p67 = scmp.ne.s32.totalorder %s56, %s57
      %p68 = scmp.eq.s32.totalorder %s22, 0
      %p69 = por %p67, %p68
      %p70 = scmp.ne.s32.totalorder %s56, %s57
      %p71 = scmp.eq.s32.totalorder %s23, 1
      %p72 = por %p70, %p71
      %p74 = scmp.ne.s32.totalorder %s57, %s73
      %p75 = scmp.eq.s32.totalorder %s23, 0
      %p76 = por %p74, %p75
      %s77 = ssub.s32 %s17, %s24
      %p78 = scmp.eq.s32.totalorder %s77, 0
      %s80 = sadd.s32 %s79, 1
      %s81 = scalar_select %p78, %s79, %s80
      %p84 = pneg %p78
      %p85 = scmp.eq.s32.totalorder %s17, 1
      %p86 = por %p84, %p85
      %p87 = scmp.ne.s32.totalorder %s79, %s82
      %p88 = scmp.eq.s32.totalorder %s17, 0
      %p89 = por %p87, %p88
      %p90 = scmp.ne.s32.totalorder %s79, %s82
      %p91 = scmp.eq.s32.totalorder %s22, 1
      %p92 = por %p90, %p91
      %p93 = scmp.ne.s32.totalorder %s82, %s83
      %p94 = scmp.eq.s32.totalorder %s22, 0
      %p95 = por %p93, %p94
      %p96 = scmp.ne.s32.totalorder %s82, %s83
      %p97 = scmp.eq.s32.totalorder %s23, 1
      %p98 = por %p96, %p97
      %p100 = scmp.ne.s32.totalorder %s83, %s99
      %p101 = scmp.eq.s32.totalorder %s23, 0
      %p102 = por %p100, %p101
      %p103 = scmp.le.s32.totalorder 1, %s17
      %p104 = scmp.lt.s32.totalorder %s17, 3
      %p105 = pnand %p103, %p104
      %p106 = pneg %p105
      // Predicated region
      $region9: #{tpu_custom_call.1} parent=5 // pred_check
        _
      $region10: #{tpu_custom_call.1} parent=5 // pred_check_branch
        %108 = sbr.rel (%p105) target = $region12
      $region11: #{tpu_custom_call.1} parent=5 // pred_region
        %s109 = ssub.s32 %s17, 1
      $region12: #{tpu_custom_call.1} parent=5 // pred_fallthru
        _
      %p110 = scmp.lt.s32.totalorder %s17, 2
      // Predicated region
      $region13: #{tpu_custom_call.1} parent=5 // pred_check
        %p111 = pneg %p110
      $region14: #{tpu_custom_call.1} parent=5 // pred_check_branch
        %113 = sbr.rel (%p111) target = $region16
      $region15: #{tpu_custom_call.1} parent=5 // pred_region
        // Predicated region
        $region17: #{tpu_custom_call.1} parent=15 // pred_check
          %p114 = pneg %p37
        $region18: #{tpu_custom_call.1} parent=15 // pred_check_branch
          %116 = sbr.rel (%p114) target = $region20
        $region19: #{tpu_custom_call.1} parent=15 // pred_region
          %s117 = sand.u32 %s27, 1
          %s118 = scalar_lea.sflag [#allocation3], %s117
          %s119 = sand.u32 %s27, 1
          %s120 = smul.addr %s119, 448
          %s121 = scalar_lea.vmem [#allocation2], %s120
          %s122 = smul.u32 7, %s17
          %s123 = ssub.s32 13, %s122
          %p124 = scmp.lt.s32.totalorder %s123, 7
          %s125 = scalar_select %p124, %s123, 7
          %s126 = smul.u32 128, %s125
          %s127 = smul.u32 %s126, 8
          %s129 = ssub.s32 7168, %s127
          %130 = vsyncadd %s118, %s129
          %p131 = scmp.ne.s32.totalorder 0, %s127
          %s132 = smul.addr %s122, 8
          %s133 = smul.addr %s132, 128
          %s134 = scalar_lea.hbm %s0, %s133
          %s135 = smul.u32 64, %s125
          %s136 = sshll.u32 %s121, 4
          %s137 = int_to_ptr.vmem [resolvable:$true] %s136
          %s138 = sshll.u32 %s135, 4
          %142 = dma.hbm_to_vmem [thread:$0]  (%p131), %s134, %s138, %s137, %s118, 1024, 1024, 64
        $region20: #{tpu_custom_call.1} parent=15 // pred_fallthru
          _
        // Predicated region
        $region21: #{tpu_custom_call.1} parent=15 // pred_check
          %p143 = pneg %p63
        $region22: #{tpu_custom_call.1} parent=15 // pred_check_branch
          %145 = sbr.rel (%p143) target = $region24
        $region23: #{tpu_custom_call.1} parent=15 // pred_region
          %s146 = sand.u32 %s53, 1
          %s147 = scalar_lea.sflag [#allocation6], %s146
          %s148 = sand.u32 %s53, 1
          %s149 = smul.addr %s148, 448
          %s150 = scalar_lea.vmem [#allocation5], %s149
          %s151 = smul.u32 7, %s17
          %s152 = ssub.s32 13, %s151
          %p153 = scmp.lt.s32.totalorder %s152, 7
          %s154 = scalar_select %p153, %s152, 7
          %s155 = smul.u32 128, %s154
          %s156 = smul.u32 %s155, 8
          %s158 = ssub.s32 7168, %s156
          %159 = vsyncadd %s147, %s158
          %p160 = scmp.ne.s32.totalorder 0, %s156
          %s161 = smul.addr %s151, 8
          %s162 = smul.addr %s161, 128
          %s163 = scalar_lea.hbm %s1, %s162
          %s164 = smul.u32 64, %s154
          %s165 = sshll.u32 %s150, 4
          %s166 = int_to_ptr.vmem [resolvable:$true] %s165
          %s167 = sshll.u32 %s164, 4
          %171 = dma.hbm_to_vmem [thread:$0]  (%p160), %s163, %s167, %s166, %s147, 1024, 1024, 64
        $region24: #{tpu_custom_call.1} parent=15 // pred_fallthru
          _
      $region16: #{tpu_custom_call.1} parent=5 // pred_fallthru
        _
      %p172 = scmp.le.s32.totalorder 1, %s17
      %p173 = scmp.lt.s32.totalorder %s17, 3
      %p174 = pnand %p172, %p173
      %p175 = pneg %p174
      // Predicated region
      $region25: #{tpu_custom_call.1} parent=5 // pred_check
        _
      $region26: #{tpu_custom_call.1} parent=5 // pred_check_branch
        %177 = sbr.rel (%p174) target = $region28
      $region27: #{tpu_custom_call.1} parent=5 // pred_region
        %s178 = ssub.s32 %s17, 1
        %s179 = sand.u32 %s30, 1
        %s180 = scalar_lea.sflag [#allocation3], %s179
        %s181 = sand.u32 %s30, 1
        %s182 = smul.addr %s181, 448
        %s183 = scalar_lea.vmem [#allocation2], %s182
        // Predicated region
        $region29: #{tpu_custom_call.1} parent=27 // pred_check
          %p184 = pneg %p43
        $region30: #{tpu_custom_call.1} parent=27 // pred_check_branch
          %186 = sbr.rel (%p184) target = $region32
        $region31: #{tpu_custom_call.1} parent=27 // pred_region
          %187 = dma.done %s180, 7168
        $region32: #{tpu_custom_call.1} parent=27 // pred_fallthru
          _
        %s188 = sand.u32 %s56, 1
        %s189 = scalar_lea.sflag [#allocation6], %s188
        %s190 = sand.u32 %s56, 1
        %s191 = smul.addr %s190, 448
        %s192 = scalar_lea.vmem [#allocation5], %s191
        // Predicated region
        $region33: #{tpu_custom_call.1} parent=27 // pred_check
          %p193 = pneg %p69
        $region34: #{tpu_custom_call.1} parent=27 // pred_check_branch
          %195 = sbr.rel (%p193) target = $region36
        $region35: #{tpu_custom_call.1} parent=27 // pred_region
          %196 = dma.done %s189, 7168
        $region36: #{tpu_custom_call.1} parent=27 // pred_fallthru
          _
        %s197 = sand.u32 %s30, 1
        %s198 = scalar_lea.sflag [#allocation3], %s197
        %s199 = sand.u32 %s30, 1
        %s200 = smul.addr %s199, 448
        %s201 = scalar_lea.vmem [#allocation2], %s200
        %p202 = pneg %p43
        %p203 = pneg %p40
        %s204 = sand.u32 %s56, 1
        %s205 = scalar_lea.sflag [#allocation6], %s204
        %s206 = sand.u32 %s56, 1
        %s207 = smul.addr %s206, 448
        %s208 = scalar_lea.vmem [#allocation5], %s207
        %p209 = pneg %p69
        %p210 = pneg %p66
        %p211 = pneg %p95
        %p212 = pneg %p92
        %s213 = sand.u32 %s82, 1
        %s214 = scalar_lea.sflag [#allocation4], %s213
        %s215 = sand.u32 %s82, 1
        %s216 = smul.addr %s215, 448
        %s217 = scalar_lea.vmem [#allocation7], %s216
        %s218 = smul.u32 7, %s22
        %s219 = ssub.s32 13, %s218
        %p220 = scmp.lt.s32.totalorder %s219, 7
        %s221 = scalar_select %p220, %s219, 7
        %s222 = smul.u32 128, %s221
        %s223 = smul.u32 %s222, 8
        %s224 = smul.u32 7, %s22
        %s225 = ssub.s32 13, %s224
        %p226 = scmp.lt.s32.totalorder %s225, 7
        %s227 = scalar_select %p226, %s225, 7
        %s228 = smul.u32 128, %s227
        %s229 = smul.u32 %s228, 8
        %s230 = smul.u32 7, %s22
        %s231 = ssub.s32 13, %s230
        %p232 = scmp.lt.s32.totalorder %s231, 7
        %s233 = scalar_select %p232, %s231, 7
        %s234 = smul.u32 128, %s233
        %s235 = smul.u32 %s234, 8
        %v236 = vld [vmem:[%s183] sm:$0xff]
        %v237 = vld [vmem:[%s183 + $0x8] sm:$0xff]
        %v238 = vld [vmem:[%s183 + $0x10] sm:$0xff]
        %v239 = vld [vmem:[%s183 + $0x18] sm:$0xff]
        %v240 = vld [vmem:[%s183 + $0x20] sm:$0xff]
        %v241 = vld [vmem:[%s183 + $0x28] sm:$0xff]
        %v242 = vld [vmem:[%s183 + $0x30] sm:$0xff]
        %v243 = vld [vmem:[%s183 + $0x38] sm:$0xff]
        %v244 = vld [vmem:[%s183 + $0x40] sm:$0xff]
        %v245 = vld [vmem:[%s183 + $0x48] sm:$0xff]
        %v246 = vld [vmem:[%s183 + $0x50] sm:$0xff]
        %v247 = vld [vmem:[%s183 + $0x58] sm:$0xff]
        %v248 = vld [vmem:[%s183 + $0x60] sm:$0xff]
        %v249 = vld [vmem:[%s183 + $0x68] sm:$0xff]
        %v250 = vld [vmem:[%s183 + $0x70] sm:$0xff]
        %v251 = vld [vmem:[%s183 + $0x78] sm:$0xff]
        %v252 = vld [vmem:[%s183 + $0x80] sm:$0xff]
        %v253 = vld [vmem:[%s183 + $0x88] sm:$0xff]
        %v254 = vld [vmem:[%s183 + $0x90] sm:$0xff]
        %v255 = vld [vmem:[%s183 + $0x98] sm:$0xff]
        %v256 = vld [vmem:[%s183 + $0xa0] sm:$0xff]
        %v257 = vld [vmem:[%s183 + $0xa8] sm:$0xff]
        %v258 = vld [vmem:[%s183 + $0xb0] sm:$0xff]
        %v259 = vld [vmem:[%s183 + $0xb8] sm:$0xff]
        %v260 = vld [vmem:[%s183 + $0xc0] sm:$0xff]
        %v261 = vld [vmem:[%s183 + $0xc8] sm:$0xff]
        %v262 = vld [vmem:[%s183 + $0xd0] sm:$0xff]
        %v263 = vld [vmem:[%s183 + $0xd8] sm:$0xff]
        %v264 = vld [vmem:[%s183 + $0xe0] sm:$0xff]
        %v265 = vld [vmem:[%s183 + $0xe8] sm:$0xff]
        %v266 = vld [vmem:[%s183 + $0xf0] sm:$0xff]
        %v267 = vld [vmem:[%s183 + $0xf8] sm:$0xff]
        %v268 = vld [vmem:[%s183 + $0x100] sm:$0xff]
        %v269 = vld [vmem:[%s183 + $0x108] sm:$0xff]
        %v270 = vld [vmem:[%s183 + $0x110] sm:$0xff]
        %v271 = vld [vmem:[%s183 + $0x118] sm:$0xff]
        %v272 = vld [vmem:[%s183 + $0x120] sm:$0xff]
        %v273 = vld [vmem:[%s183 + $0x128] sm:$0xff]
        %v274 = vld [vmem:[%s183 + $0x130] sm:$0xff]
        %v275 = vld [vmem:[%s183 + $0x138] sm:$0xff]
        %v276 = vld [vmem:[%s183 + $0x140] sm:$0xff]
        %v277 = vld [vmem:[%s183 + $0x148] sm:$0xff]
        %v278 = vld [vmem:[%s183 + $0x150] sm:$0xff]
        %v279 = vld [vmem:[%s183 + $0x158] sm:$0xff]
        %v280 = vld [vmem:[%s183 + $0x160] sm:$0xff]
        %v281 = vld [vmem:[%s183 + $0x168] sm:$0xff]
        %v282 = vld [vmem:[%s183 + $0x170] sm:$0xff]
        %v283 = vld [vmem:[%s183 + $0x178] sm:$0xff]
        %v284 = vld [vmem:[%s183 + $0x180] sm:$0xff]
        %v285 = vld [vmem:[%s183 + $0x188] sm:$0xff]
        %v286 = vld [vmem:[%s183 + $0x190] sm:$0xff]
        %v287 = vld [vmem:[%s183 + $0x198] sm:$0xff]
        %v288 = vld [vmem:[%s183 + $0x1a0] sm:$0xff]
        %v289 = vld [vmem:[%s183 + $0x1a8] sm:$0xff]
        %v290 = vld [vmem:[%s183 + $0x1b0] sm:$0xff]
        %v291 = vld [vmem:[%s183 + $0x1b8] sm:$0xff]
        %v292 = vld [vmem:[%s192] sm:$0xff]
        %v293 = vld [vmem:[%s192 + $0x8] sm:$0xff]
        %v294 = vld [vmem:[%s192 + $0x10] sm:$0xff]
        %v295 = vld [vmem:[%s192 + $0x18] sm:$0xff]
        %v296 = vld [vmem:[%s192 + $0x20] sm:$0xff]
        %v297 = vld [vmem:[%s192 + $0x28] sm:$0xff]
        %v298 = vld [vmem:[%s192 + $0x30] sm:$0xff]
        %v299 = vld [vmem:[%s192 + $0x38] sm:$0xff]
        %v300 = vld [vmem:[%s192 + $0x40] sm:$0xff]
        %v301 = vld [vmem:[%s192 + $0x48] sm:$0xff]
        %v302 = vld [vmem:[%s192 + $0x50] sm:$0xff]
        %v303 = vld [vmem:[%s192 + $0x58] sm:$0xff]
        %v304 = vld [vmem:[%s192 + $0x60] sm:$0xff]
        %v305 = vld [vmem:[%s192 + $0x68] sm:$0xff]
        %v306 = vld [vmem:[%s192 + $0x70] sm:$0xff]
        %v307 = vld [vmem:[%s192 + $0x78] sm:$0xff]
        %v308 = vld [vmem:[%s192 + $0x80] sm:$0xff]
        %v309 = vld [vmem:[%s192 + $0x88] sm:$0xff]
        %v310 = vld [vmem:[%s192 + $0x90] sm:$0xff]
        %v311 = vld [vmem:[%s192 + $0x98] sm:$0xff]
        %v312 = vld [vmem:[%s192 + $0xa0] sm:$0xff]
        %v313 = vld [vmem:[%s192 + $0xa8] sm:$0xff]
        %v314 = vld [vmem:[%s192 + $0xb0] sm:$0xff]
        %v315 = vld [vmem:[%s192 + $0xb8] sm:$0xff]
        %v316 = vld [vmem:[%s192 + $0xc0] sm:$0xff]
        %v317 = vld [vmem:[%s192 + $0xc8] sm:$0xff]
        %v318 = vld [vmem:[%s192 + $0xd0] sm:$0xff]
        %v319 = vld [vmem:[%s192 + $0xd8] sm:$0xff]
        %v320 = vld [vmem:[%s192 + $0xe0] sm:$0xff]
        %v321 = vld [vmem:[%s192 + $0xe8] sm:$0xff]
        %v322 = vld [vmem:[%s192 + $0xf0] sm:$0xff]
        %v323 = vld [vmem:[%s192 + $0xf8] sm:$0xff]
        %v324 = vld [vmem:[%s192 + $0x100] sm:$0xff]
        %v325 = vld [vmem:[%s192 + $0x108] sm:$0xff]
        %v326 = vld [vmem:[%s192 + $0x110] sm:$0xff]
        %v327 = vld [vmem:[%s192 + $0x118] sm:$0xff]
        %v328 = vld [vmem:[%s192 + $0x120] sm:$0xff]
        %v329 = vld [vmem:[%s192 + $0x128] sm:$0xff]
        %v330 = vld [vmem:[%s192 + $0x130] sm:$0xff]
        %v331 = vld [vmem:[%s192 + $0x138] sm:$0xff]
        %v332 = vld [vmem:[%s192 + $0x140] sm:$0xff]
        %v333 = vld [vmem:[%s192 + $0x148] sm:$0xff]
        %v334 = vld [vmem:[%s192 + $0x150] sm:$0xff]
        %v335 = vld [vmem:[%s192 + $0x158] sm:$0xff]
        %v336 = vld [vmem:[%s192 + $0x160] sm:$0xff]
        %v337 = vld [vmem:[%s192 + $0x168] sm:$0xff]
        %v338 = vld [vmem:[%s192 + $0x170] sm:$0xff]
        %v339 = vld [vmem:[%s192 + $0x178] sm:$0xff]
        %v340 = vld [vmem:[%s192 + $0x180] sm:$0xff]
        %v341 = vld [vmem:[%s192 + $0x188] sm:$0xff]
        %v342 = vld [vmem:[%s192 + $0x190] sm:$0xff]
        %v343 = vld [vmem:[%s192 + $0x198] sm:$0xff]
        %v344 = vld [vmem:[%s192 + $0x1a0] sm:$0xff]
        %v345 = vld [vmem:[%s192 + $0x1a8] sm:$0xff]
        %v346 = vld [vmem:[%s192 + $0x1b0] sm:$0xff]
        %v347 = vld [vmem:[%s192 + $0x1b8] sm:$0xff]
        %v348 = vadd.f32 %v236, %v292
        %v349 = vadd.f32 %v237, %v293
        %v350 = vadd.f32 %v238, %v294
        %v351 = vadd.f32 %v239, %v295
        %v352 = vadd.f32 %v240, %v296
        %v353 = vadd.f32 %v241, %v297
        %v354 = vadd.f32 %v242, %v298
        %v355 = vadd.f32 %v243, %v299
        %v356 = vadd.f32 %v244, %v300
        %v357 = vadd.f32 %v245, %v301
        %v358 = vadd.f32 %v246, %v302
        %v359 = vadd.f32 %v247, %v303
        %v360 = vadd.f32 %v248, %v304
        %v361 = vadd.f32 %v249, %v305
        %v362 = vadd.f32 %v250, %v306
        %v363 = vadd.f32 %v251, %v307
        %v364 = vadd.f32 %v252, %v308
        %v365 = vadd.f32 %v253, %v309
        %v366 = vadd.f32 %v254, %v310
        %v367 = vadd.f32 %v255, %v311
        %v368 = vadd.f32 %v256, %v312
        %v369 = vadd.f32 %v257, %v313
        %v370 = vadd.f32 %v258, %v314
        %v371 = vadd.f32 %v259, %v315
        %v372 = vadd.f32 %v260, %v316
        %v373 = vadd.f32 %v261, %v317
        %v374 = vadd.f32 %v262, %v318
        %v375 = vadd.f32 %v263, %v319
        %v376 = vadd.f32 %v264, %v320
        %v377 = vadd.f32 %v265, %v321
        %v378 = vadd.f32 %v266, %v322
        %v379 = vadd.f32 %v267, %v323
        %v380 = vadd.f32 %v268, %v324
        %v381 = vadd.f32 %v269, %v325
        %v382 = vadd.f32 %v270, %v326
        %v383 = vadd.f32 %v271, %v327
        %v384 = vadd.f32 %v272, %v328
        %v385 = vadd.f32 %v273, %v329
        %v386 = vadd.f32 %v274, %v330
        %v387 = vadd.f32 %v275, %v331
        %v388 = vadd.f32 %v276, %v332
        %v389 = vadd.f32 %v277, %v333
        %v390 = vadd.f32 %v278, %v334
        %v391 = vadd.f32 %v279, %v335
        %v392 = vadd.f32 %v280, %v336
        %v393 = vadd.f32 %v281, %v337
        %v394 = vadd.f32 %v282, %v338
        %v395 = vadd.f32 %v283, %v339
        %v396 = vadd.f32 %v284, %v340
        %v397 = vadd.f32 %v285, %v341
        %v398 = vadd.f32 %v286, %v342
        %v399 = vadd.f32 %v287, %v343
        %v400 = vadd.f32 %v288, %v344
        %v401 = vadd.f32 %v289, %v345
        %v402 = vadd.f32 %v290, %v346
        %v403 = vadd.f32 %v291, %v347
        %404 = vst [vmem:[%s217] sm:$0xff] %v348
        %405 = vst [vmem:[%s217 + $0x8] sm:$0xff] %v349
        %406 = vst [vmem:[%s217 + $0x10] sm:$0xff] %v350
        %407 = vst [vmem:[%s217 + $0x18] sm:$0xff] %v351
        %408 = vst [vmem:[%s217 + $0x20] sm:$0xff] %v352
        %409 = vst [vmem:[%s217 + $0x28] sm:$0xff] %v353
        %410 = vst [vmem:[%s217 + $0x30] sm:$0xff] %v354
        %411 = vst [vmem:[%s217 + $0x38] sm:$0xff] %v355
        %412 = vst [vmem:[%s217 + $0x40] sm:$0xff] %v356
        %413 = vst [vmem:[%s217 + $0x48] sm:$0xff] %v357
        %414 = vst [vmem:[%s217 + $0x50] sm:$0xff] %v358
        %415 = vst [vmem:[%s217 + $0x58] sm:$0xff] %v359
        %416 = vst [vmem:[%s217 + $0x60] sm:$0xff] %v360
        %417 = vst [vmem:[%s217 + $0x68] sm:$0xff] %v361
        %418 = vst [vmem:[%s217 + $0x70] sm:$0xff] %v362
        %419 = vst [vmem:[%s217 + $0x78] sm:$0xff] %v363
        %420 = vst [vmem:[%s217 + $0x80] sm:$0xff] %v364
        %421 = vst [vmem:[%s217 + $0x88] sm:$0xff] %v365
        %422 = vst [vmem:[%s217 + $0x90] sm:$0xff] %v366
        %423 = vst [vmem:[%s217 + $0x98] sm:$0xff] %v367
        %424 = vst [vmem:[%s217 + $0xa0] sm:$0xff] %v368
        %425 = vst [vmem:[%s217 + $0xa8] sm:$0xff] %v369
        %426 = vst [vmem:[%s217 + $0xb0] sm:$0xff] %v370
        %427 = vst [vmem:[%s217 + $0xb8] sm:$0xff] %v371
        %428 = vst [vmem:[%s217 + $0xc0] sm:$0xff] %v372
        %429 = vst [vmem:[%s217 + $0xc8] sm:$0xff] %v373
        %430 = vst [vmem:[%s217 + $0xd0] sm:$0xff] %v374
        %431 = vst [vmem:[%s217 + $0xd8] sm:$0xff] %v375
        %432 = vst [vmem:[%s217 + $0xe0] sm:$0xff] %v376
        %433 = vst [vmem:[%s217 + $0xe8] sm:$0xff] %v377
        %434 = vst [vmem:[%s217 + $0xf0] sm:$0xff] %v378
        %435 = vst [vmem:[%s217 + $0xf8] sm:$0xff] %v379
        %436 = vst [vmem:[%s217 + $0x100] sm:$0xff] %v380
        %437 = vst [vmem:[%s217 + $0x108] sm:$0xff] %v381
        %438 = vst [vmem:[%s217 + $0x110] sm:$0xff] %v382
        %439 = vst [vmem:[%s217 + $0x118] sm:$0xff] %v383
        %440 = vst [vmem:[%s217 + $0x120] sm:$0xff] %v384
        %441 = vst [vmem:[%s217 + $0x128] sm:$0xff] %v385
        %442 = vst [vmem:[%s217 + $0x130] sm:$0xff] %v386
        %443 = vst [vmem:[%s217 + $0x138] sm:$0xff] %v387
        %444 = vst [vmem:[%s217 + $0x140] sm:$0xff] %v388
        %445 = vst [vmem:[%s217 + $0x148] sm:$0xff] %v389
        %446 = vst [vmem:[%s217 + $0x150] sm:$0xff] %v390
        %447 = vst [vmem:[%s217 + $0x158] sm:$0xff] %v391
        %448 = vst [vmem:[%s217 + $0x160] sm:$0xff] %v392
        %449 = vst [vmem:[%s217 + $0x168] sm:$0xff] %v393
        %450 = vst [vmem:[%s217 + $0x170] sm:$0xff] %v394
        %451 = vst [vmem:[%s217 + $0x178] sm:$0xff] %v395
        %452 = vst [vmem:[%s217 + $0x180] sm:$0xff] %v396
        %453 = vst [vmem:[%s217 + $0x188] sm:$0xff] %v397
        %454 = vst [vmem:[%s217 + $0x190] sm:$0xff] %v398
        %455 = vst [vmem:[%s217 + $0x198] sm:$0xff] %v399
        %456 = vst [vmem:[%s217 + $0x1a0] sm:$0xff] %v400
        %457 = vst [vmem:[%s217 + $0x1a8] sm:$0xff] %v401
        %458 = vst [vmem:[%s217 + $0x1b0] sm:$0xff] %v402
        %459 = vst [vmem:[%s217 + $0x1b8] sm:$0xff] %v403
        %s460 = sand.u32 %s82, 1
        %s461 = scalar_lea.sflag [#allocation4], %s460
        %s462 = sand.u32 %s82, 1
        %s463 = smul.addr %s462, 448
        %s464 = scalar_lea.vmem [#allocation7], %s463
        // Predicated region
        $region37: #{tpu_custom_call.1} parent=27 // pred_check
          %p465 = pneg %p92
        $region38: #{tpu_custom_call.1} parent=27 // pred_check_branch
          %467 = sbr.rel (%p465) target = $region40
        $region39: #{tpu_custom_call.1} parent=27 // pred_region
          %s468 = smul.u32 7, %s22
          %s469 = ssub.s32 13, %s468
          %p470 = scmp.lt.s32.totalorder %s469, 7
          %s471 = scalar_select %p470, %s469, 7
          %s472 = smul.u32 128, %s471
          %s473 = smul.u32 %s472, 8
          %s475 = ssub.s32 7168, %s473
          %476 = vsyncadd %s461, %s475
          %p477 = scmp.ne.s32.totalorder 0, %s473
          %s478 = smul.addr %s468, 8
          %s479 = smul.addr %s478, 128
          %s480 = scalar_lea.hbm %s2, %s479
          %s481 = smul.u32 64, %s471
          %s482 = sshll.u32 %s464, 4
          %s483 = int_to_ptr.vmem [resolvable:$true] %s482
          %s484 = sshll.u32 %s481, 4
          %488 = dma.vmem_to_hbm [thread:$0]  (%p477), %s483, %s484, %s480, %s461, 1024, 1024, 64
        $region40: #{tpu_custom_call.1} parent=27 // pred_fallthru
          _
      $region28: #{tpu_custom_call.1} parent=5 // pred_fallthru
        _
      %p489 = scmp.le.s32.totalorder 2, %s17
      // Predicated region
      $region41: #{tpu_custom_call.1} parent=5 // pred_check
        %p490 = pneg %p489
      $region42: #{tpu_custom_call.1} parent=5 // pred_check_branch
        %492 = sbr.rel (%p490) target = $region44
      $region43: #{tpu_custom_call.1} parent=5 // pred_region
        %s493 = ssub.s32 %s17, 2
        // Predicated region
        $region45: #{tpu_custom_call.1} parent=43 // pred_check
          %p494 = pneg %p98
        $region46: #{tpu_custom_call.1} parent=43 // pred_check_branch
          %496 = sbr.rel (%p494) target = $region48
        $region47: #{tpu_custom_call.1} parent=43 // pred_region
          %s497 = sand.u32 %s83, 1
          %s498 = scalar_lea.sflag [#allocation4], %s497
          %s499 = sand.u32 %s83, 1
          %s500 = smul.addr %s499, 448
          %s501 = scalar_lea.vmem [#allocation7], %s500
          %502 = dma.done %s498, 7168
        $region48: #{tpu_custom_call.1} parent=43 // pred_fallthru
          _
      $region44: #{tpu_custom_call.1} parent=5 // pred_fallthru
        _
    $region6: #{tpu_custom_call.1} parent=1 // loop_footer
      %s21 = sadd.s32 1, %s17
    $region7: #{tpu_custom_call.1} parent=1 // loop_footer_branch
      %16 = sbr.rel target = $region3
    $region8: #{tpu_custom_call.1} parent=1 // loop_exit
      _
    %503 = vsyncpa [#allocation3], 1
    %s504 = scalar_lea.sflag [#allocation3], 1
    %505 = vsyncpa %s504, 1
    %506 = vsyncpa [#allocation6], 1
    %s507 = scalar_lea.sflag [#allocation6], 1
    %508 = vsyncpa %s507, 1
    %509 = vsyncpa [#allocation4], 1
    %s510 = scalar_lea.sflag [#allocation4], 1
    %511 = vsyncpa %s510, 1

</llo_original>
